<compile_context>
chip_gen: v5e
topology: v5e:2x2
jax: 0.10.0
libtpu: 0.0.40
codegen_flags: <defaults>
</compile_context>

<pallas_src>
import jax
import jax.numpy as jnp
from jax.experimental import pallas as pl
from jax.experimental.pallas import tpu as pltpu


def _binary_classifier_kernel(w_ref, b_ref, x_ref, o_ref):
    # w_ref: SMEM [2] f32, b_ref: SMEM [1] f32
    # x_ref: VMEM [2, TB] f32 (feature-major, lane-dense)
    # o_ref: VMEM [1, TB] f32 (lane-dense output -> unmasked full-width stores)
    w0 = w_ref[0]
    w1 = w_ref[1]
    b = b_ref[0]
    # VPU fused multiply-add across the batch lanes (no MXU for a 2-wide dot).
    z = w0 * x_ref[0:1, :] + w1 * x_ref[1:2, :] + b          # [1, TB]
    # Exact sigmoid: exp on the EUP, divide on the VPU.
    o_ref[...] = 1.0 / (1.0 + jnp.exp(-z))


def binary_classifier(x, weight, bias, *, tb=1024):
    """Forward pass: sigmoid(x @ weight.T + bias).

    x:      [B, 2] float32
    weight: [1, 2] float32  (PyTorch nn.Linear convention)
    bias:   [1]    float32
    returns [B, 1] float32
    """
    B = x.shape[0]
    # Batch tile: multiple of the 128-lane width, no larger than needed.
    b_min = ((B + 127) // 128) * 128
    tb = max(128, min(tb, b_min))
    assert tb % 128 == 0
    num_tiles = pl.cdiv(B, tb)
    b_pad = num_tiles * tb

    # Feature-major, lane-dense layout; zero-pad batch to a whole tile count.
    x_t = jnp.zeros((2, b_pad), jnp.float32).at[:, :B].set(
        x.astype(jnp.float32).T)
    w_vec = weight.astype(jnp.float32).reshape(2)   # scalars -> SMEM
    b_vec = bias.astype(jnp.float32).reshape(1)     # scalar  -> SMEM

    out = pl.pallas_call(
        _binary_classifier_kernel,
        out_shape=jax.ShapeDtypeStruct((1, b_pad), jnp.float32),
        grid=(num_tiles,),
        in_specs=[
            pl.BlockSpec(memory_space=pltpu.MemorySpace.SMEM),   # weight [2]
            pl.BlockSpec(memory_space=pltpu.MemorySpace.SMEM),   # bias   [1]
            pl.BlockSpec((2, tb), lambda i: (0, i)),             # x tile
        ],
        out_specs=pl.BlockSpec((1, tb), lambda i: (0, i)),
        compiler_params=pltpu.CompilerParams(
            dimension_semantics=("parallel",)),
    )(w_vec, b_vec, x_t)

    # Back to the PyTorch-facing [B, 1] layout (drop batch padding).
    return out[0, :B].reshape(B, 1)


if __name__ == "__main__":
    key = jax.random.PRNGKey(0)
    kx, kw, kb = jax.random.split(key, 3)

    B = 8  # small example batch; kernel itself scales to large B via the grid
    x = jax.random.normal(kx, (B, 2), dtype=jnp.float32)

    # Deterministic parameter init mimicking nn.Linear(2, 1) default
    # (uniform in [-1/sqrt(in_features), 1/sqrt(in_features)]).
    bound = 1.0 / jnp.sqrt(2.0)
    weight = jax.random.uniform(kw, (1, 2), minval=-bound, maxval=bound,
                                dtype=jnp.float32)
    bias = jax.random.uniform(kb, (1,), minval=-bound, maxval=bound,
                              dtype=jnp.float32)

    out = binary_classifier(x, weight, bias)
    out = jax.block_until_ready(out)

    # Reference check in plain JAX (same math as the PyTorch forward).
    ref = jax.nn.sigmoid(x @ weight.T + bias)
    assert out.shape == (B, 1)
    assert jnp.allclose(out, ref, atol=1e-5, rtol=1e-5), "mismatch vs reference"

    print("KERNEL_OK")
</pallas_src>

<mosaic_0001>
module attributes {stable_mosaic.version = 11 : i64} {
  func.func @_binary_classifier_kernel(%arg0: i32, %arg1: memref<2xf32, #tpu.memory_space<smem>>, %arg2: memref<1xf32, #tpu.memory_space<smem>>, %arg3: memref<2x128xf32, #tpu.memory_space<vmem>>, %arg4: memref<1x128xf32, #tpu.memory_space<vmem>>) attributes {dimension_semantics = [#tpu.dimension_semantics<parallel>], iteration_bounds = array<i64: 1>, scalar_prefetch = 0 : i64, scratch_operands = 0 : i64, tpu.core_type = #tpu.core_type<tc>, window_params = [{transform_indices = @transform_0, window_bounds = array<i64: 2>}, {transform_indices = @transform_1, window_bounds = array<i64: 1>}, {transform_indices = @transform_2, window_bounds = array<i64: 2, 128>}, {transform_indices = @transform_3, window_bounds = array<i64: 1, 128>}]} {
    %c0 = arith.constant 0 : index
    %0 = memref.load %arg1[%c0] : memref<2xf32, #tpu.memory_space<smem>>
    %c1 = arith.constant 1 : index
    %1 = memref.load %arg1[%c1] : memref<2xf32, #tpu.memory_space<smem>>
    %c0_0 = arith.constant 0 : index
    %2 = memref.load %arg2[%c0_0] : memref<1xf32, #tpu.memory_space<smem>>
    %c0_1 = arith.constant 0 : index
    %c0_2 = arith.constant 0 : index
    %3 = vector.load %arg3[%c0_1, %c0_2] : memref<2x128xf32, #tpu.memory_space<vmem>>, vector<1x128xf32>
    %4 = vector.broadcast %0 : f32 to vector<1x128xf32>
    %5 = arith.mulf %4, %3 : vector<1x128xf32>
    %c1_3 = arith.constant 1 : index
    %c0_4 = arith.constant 0 : index
    %6 = vector.load %arg3[%c1_3, %c0_4] : memref<2x128xf32, #tpu.memory_space<vmem>>, vector<1x128xf32>
    %7 = vector.broadcast %1 : f32 to vector<1x128xf32>
    %8 = arith.mulf %7, %6 : vector<1x128xf32>
    %9 = arith.addf %5, %8 : vector<1x128xf32>
    %10 = vector.broadcast %2 : f32 to vector<1x128xf32>
    %11 = arith.addf %9, %10 : vector<1x128xf32>
    %cst = arith.constant 0.000000e+00 : f32
    %12 = vector.broadcast %cst : f32 to vector<1x128xf32>
    %13 = arith.subf %12, %11 : vector<1x128xf32>
    %14 = math.exp %13 : vector<1x128xf32>
    %cst_5 = arith.constant 1.000000e+00 : f32
    %15 = vector.broadcast %cst_5 : f32 to vector<1x128xf32>
    %16 = arith.addf %15, %14 : vector<1x128xf32>
    %cst_6 = arith.constant 1.000000e+00 : f32
    %17 = vector.broadcast %cst_6 : f32 to vector<1x128xf32>
    %18 = arith.divf %17, %16 : vector<1x128xf32>
    %c0_7 = arith.constant 0 : index
    %c0_8 = arith.constant 0 : index
    %19 = vector.load %arg4[%c0_7, %c0_8] : memref<1x128xf32, #tpu.memory_space<vmem>>, vector<1x128xf32>
    tpu.vector_store %arg4[%c0_7, %c0_8], %18 {strides = array<i32>} : memref<1x128xf32, #tpu.memory_space<vmem>>, vector<1x128xf32>,
    return
  }
  func.func @transform_0(%arg0: i32) -> i32 {
    %c0_i32 = arith.constant 0 : i32
    %c0_i32_0 = arith.constant 0 : i32
    return %c0_i32 : i32
  }
  func.func @transform_1(%arg0: i32) -> i32 {
    %c0_i32 = arith.constant 0 : i32
    %c0_i32_0 = arith.constant 0 : i32
    return %c0_i32 : i32
  }
  func.func @transform_2(%arg0: i32) -> (i32, i32) {
    %c0_i32 = arith.constant 0 : i32
    %c0_i32_0 = arith.constant 0 : i32
    return %c0_i32, %arg0 : i32, i32
  }
  func.func @transform_3(%arg0: i32) -> (i32, i32) {
    %c0_i32 = arith.constant 0 : i32
    %c0_i32_0 = arith.constant 0 : i32
    return %c0_i32, %arg0 : i32, i32
  }
}

</mosaic_0001>

<llo_original>
// kernel: tpu_custom_call.1
$region0: #{tpu_custom_call.1}
  #allocation0 [shape = 'u32[]', space=smem, size = 0x4, offset = 0x4, fixed_abs, tag = 'smem constant byte address 0x4 - core index']
  #allocation1 [shape = 'u32[72,128]{1,0:T(1,128)}', space=vmem, size = 0x9000, scoped, tag = 'internal scratch']
  #allocation2 [shape = 'f32[1]{0:T(128)S(6)}', space=smem, size = 0x200, scoped, tag = 'scoped memory for tpu_custom_call.1']
  %s0 = inlined_call_operand.hbm [shape: f32[2], index: 0, kind: input, shape index: {}]
  %s1 = inlined_call_operand.<no memory space> [shape: f32[1], index: 1, kind: input, shape index: {}]
  %s2 = inlined_call_operand.vmem [shape: f32[2,128], index: 2, kind: input, shape index: {}]
  %s3 = inlined_call_operand.hbm [shape: f32[1,128], index: 3, kind: output, shape index: {}]
  %s4 = sld [smem:[#allocation0]]
  $region26: #{tpu_custom_call.1} parent=0
    _
  %s6 = ssub.s32 1, %s4
  %s7 = scalar_select 0, %s6, %s4
  %8 = sst [smem:[#allocation2]] %s1
  $region1: #{tpu_custom_call.1} parent=0
    #allocation3 [shape = 'u8[512]{0}', space=smem, size = 0x200, scoped, tag = 'input window, operand 0, single buffered']
    #allocation4 [shape = 's32[1]{0}', space=sflag, size = 0x4, scoped, tag = 'scoped memory for tpu_custom_call.1']
    #allocation5 [shape = 's32[1]{0}', space=sflag, size = 0x4, scoped, tag = 'scoped memory for tpu_custom_call.1']
    #allocation6 [shape = 'u8[512]{0}', space=vmem, size = 0x400, scoped, tag = 'output window, operand 0, single buffered']
    %9 = vsyncpa [#allocation5], 0
    %10 = vsyncpa [#allocation4], 0
    // Predicated region
    $region2: #{tpu_custom_call.1} parent=1 // pred_check
      _
    $region3: #{tpu_custom_call.1} parent=1 // pred_check_branch
      %12 = sbr.rel (0) target = $region5
    $region4: #{tpu_custom_call.1} parent=1 // pred_region
      %14 = vsyncadd [#allocation5], 0
      %s16 = sshll.u32 %s0, 4
      %s17 = int_to_ptr.hbm [resolvable:$true] %s16
      %19 = dma.hbm_to_smem %s17, 16, [#allocation3], [#allocation5]
    $region5: #{tpu_custom_call.1} parent=1 // pred_fallthru
      _
    // Predicated region
    $region6: #{tpu_custom_call.1} parent=1 // pred_check
      _
    $region7: #{tpu_custom_call.1} parent=1 // pred_check_branch
      %21 = sbr.rel (0) target = $region9
    $region8: #{tpu_custom_call.1} parent=1 // pred_region
      _
    $region9: #{tpu_custom_call.1} parent=1 // pred_fallthru
      _
    // Predicated region
    $region10: #{tpu_custom_call.1} parent=1 // pred_check
      _
    $region11: #{tpu_custom_call.1} parent=1 // pred_check_branch
      %23 = sbr.rel (0) target = $region13
    $region12: #{tpu_custom_call.1} parent=1 // pred_region
      _
    $region13: #{tpu_custom_call.1} parent=1 // pred_fallthru
      _
    // Predicated region
    $region14: #{tpu_custom_call.1} parent=1 // pred_check
      _
    $region15: #{tpu_custom_call.1} parent=1 // pred_check_branch
      %25 = sbr.rel (0) target = $region17
    $region16: #{tpu_custom_call.1} parent=1 // pred_region
      %27 = dma.done [#allocation5], 16
    $region17: #{tpu_custom_call.1} parent=1 // pred_fallthru
      _
    %28 = sfence
    %s29 = sld [smem:[#allocation3]]
    %s30 = sld [smem:[#allocation3 + $0x1]]
    %s31 = sld [smem:[#allocation2]]
    %v32 = vld [vmem:[%s2] sm:$0x1]
    %v33 = vstv %s29
    %v34 = vmul.f32 %v33, %v32
    %v35 = vld [vmem:[%s2 + $0x1] sm:$0x1]
    %v36 = vstv %s30
    %v37 = vmul.f32 %v36, %v35
    %v38 = vadd.f32 %v34, %v37
    %v39 = vstv %s31
    %v40 = vadd.f32 %v38, %v39
    %v41 = vsub.f32 0.0, %v40
    %v42 = vmul.f32 %v41, 1.442695
    %v43 = vpow.pop %v42
    %v44 = vadd.f32 %v43, 1.0
    %v45 = vrcp.pop %v44
    %v46 = vmul.f32 %v44, %v45
    %v47 = vsub.f32 1.0, %v46
    %v48 = vmul.f32 %v45, %v47
    %v49 = vadd.f32 %v45, %v48
    %vm50 = vweird.f32 %v44
    %vm51 = vweird.f32 %v45
    %vm52 = vmor %vm50, %vm51
    %v53 = vsel %vm52, %v45, %v49
    %v54 = vand.u32 2147483647, %v44
    %vm55 = vcmp.eq.f32.partialorder %v54, 8.507059e+37
    %v56 = vand.u32 %v44, 2147483648
    %v57 = vor.u32 1.1754944e-38, %v56
    %v58 = vsel %vm55, %v57, %v53
    %v59 = vmul.f32 1.0, %v58
    %60 = vst [vmem:[#allocation6] sm:$0x1] %v59
    // Predicated region
    $region18: #{tpu_custom_call.1} parent=1 // pred_check
      _
    $region19: #{tpu_custom_call.1} parent=1 // pred_check_branch
      %62 = sbr.rel (0) target = $region21
    $region20: #{tpu_custom_call.1} parent=1 // pred_region
      %64 = vsyncadd [#allocation4], 0
      %s66 = sshll.u32 [#allocation6], 4
      %s67 = int_to_ptr.vmem [resolvable:$true] %s66
      %s68 = sshll.u32 %s3, 4
      %s69 = int_to_ptr.hbm [resolvable:$true] %s68
      %71 = dma.vmem_to_hbm [thread:$0]  %s67, 16, %s69, [#allocation4]
    $region21: #{tpu_custom_call.1} parent=1 // pred_fallthru
      _
    // Predicated region
    $region22: #{tpu_custom_call.1} parent=1 // pred_check
      _
    $region23: #{tpu_custom_call.1} parent=1 // pred_check_branch
      %73 = sbr.rel (0) target = $region25
    $region24: #{tpu_custom_call.1} parent=1 // pred_region
      %75 = dma.done [#allocation4], 16
    $region25: #{tpu_custom_call.1} parent=1 // pred_fallthru
      _
    %76 = vsyncpa [#allocation4], 1
    %77 = vsyncpa [#allocation5], 1

</llo_original>
